<compile_context>
chip_gen: v5e
topology: v5e:2x2
jax: 0.10.0
libtpu: 0.0.40
codegen_flags: <defaults>
</compile_context>

<pallas_src>
from functools import partial

import jax
import jax.numpy as jnp
from jax.experimental import pallas as pl
from jax.experimental.pallas import tpu as pltpu


_PAD_MODE = {"zero": "constant", "reflect": "reflect", "replicate": "edge"}


def _conv_block_kernel(w_ref, b_ref, g_ref, bt_ref, p_ref, o_ref, *,
                       norm, activation, eps):
    """Fused conv-as-matmul + bias + norm + activation for ONE batch element.

    w_ref : (Cout, K*K*Cin)      flattened conv weight (compute dtype)
    b_ref : (Cout, 1) f32        conv bias
    g_ref : (Cout, 1) f32        LayerNorm gamma (ones when unused)
    bt_ref: (Cout, 1) f32        LayerNorm beta  (zeros when unused)
    p_ref : (1, K*K*Cin, Ho*Wo)  im2col patches for this batch element
    o_ref : (1, Cout, Ho*Wo)     lane-dense output (NCHW after a pure reshape)
    """
    # Single MXU contraction per grid step; f32 accumulation.
    acc = jnp.dot(w_ref[...], p_ref[0], preferred_element_type=jnp.float32)
    acc = acc + b_ref[...]                              # (Cout, L) + (Cout, 1)

    if norm == "in":
        # nn.InstanceNorm2d(affine=False): per-channel stats over the spatial
        # (lane) axis, biased variance, eps inside the sqrt.
        mean = jnp.mean(acc, axis=-1, keepdims=True)
        var = jnp.mean(jnp.square(acc - mean), axis=-1, keepdims=True)
        acc = (acc - mean) * jax.lax.rsqrt(var + eps)
    elif norm == "ln":
        # MUNIT LayerNorm: per-sample stats over ALL of (C,H,W), unbiased std,
        # x -> (x - mean) / (std + eps), then per-channel affine.
        n = acc.shape[0] * acc.shape[1]
        mean = jnp.mean(jnp.mean(acc, axis=-1, keepdims=True),
                        axis=0, keepdims=True)
        ssq = jnp.sum(jnp.sum(jnp.square(acc - mean), axis=-1, keepdims=True),
                      axis=0, keepdims=True)
        std = jnp.sqrt(ssq / (n - 1))
        acc = (acc - mean) / (std + eps)
        acc = acc * g_ref[...] + bt_ref[...]
    elif norm == "none":
        pass
    else:
        # TODO(synk): 'bn'/'adain' norms (unused by _netT64) not implemented.
        raise NotImplementedError(f"norm={norm}")

    if activation == "relu":
        acc = jnp.maximum(acc, 0.0)
    elif activation == "lrelu":
        acc = jnp.where(acc >= 0.0, acc, 0.2 * acc)     # MUNIT uses slope 0.2
    elif activation == "tanh":
        acc = jnp.tanh(acc)
    elif activation == "none":
        pass
    else:
        # TODO(synk): 'prelu'/'selu' (unused by _netT64) not implemented.
        raise NotImplementedError(f"activation={activation}")

    o_ref[0] = acc.astype(o_ref.dtype)


def conv2d_block(x_nchw, weight_oihw, bias, *, stride=1, padding=0,
                 norm="none", activation="relu", pad_type="zero",
                 gamma=None, beta=None, eps=1e-5,
                 compute_dtype=jnp.bfloat16):
    """Forward pass of MUNIT/UNIT Conv2dBlock. Input/output are NCHW."""
    B, Cin, H, W = x_nchw.shape
    Cout, Cin_w, K, K2 = weight_oihw.shape
    assert Cin_w == Cin and K == K2

    # Pad spatially in the wrapper ('zero' / 'reflect' / 'replicate').
    x_pad = jnp.pad(x_nchw,
                    ((0, 0), (0, 0), (padding, padding), (padding, padding)),
                    mode=_PAD_MODE[pad_type])
    Hp, Wp = H + 2 * padding, W + 2 * padding
    Ho = (Hp - K) // stride + 1
    Wo = (Wp - K) // stride + 1
    L = Ho * Wo
    KKC = K * K * Cin

    # im2col in the wrapper: (B, K*K*Cin, Ho*Wo), contraction ordering (kh,kw,cin).
    cols = []
    for kh in range(K):
        for kw in range(K):
            cols.append(jax.lax.slice(
                x_pad, (0, 0, kh, kw),
                (B, Cin, kh + (Ho - 1) * stride + 1, kw + (Wo - 1) * stride + 1),
                (1, 1, stride, stride)))                 # (B, Cin, Ho, Wo)
    patches = jnp.stack(cols, axis=1).reshape(B, KKC, L).astype(compute_dtype)

    # (Cout, Cin, K, K) -> (Cout, K, K, Cin) -> (Cout, K*K*Cin): matches patches.
    w2d = jnp.transpose(weight_oihw, (0, 2, 3, 1)).reshape(Cout, KKC)
    w2d = w2d.astype(compute_dtype)
    b2 = bias.reshape(Cout, 1).astype(jnp.float32)
    g2 = (jnp.ones((Cout,), jnp.float32) if gamma is None else gamma)
    g2 = g2.reshape(Cout, 1).astype(jnp.float32)
    bt2 = (jnp.zeros((Cout,), jnp.float32) if beta is None else beta)
    bt2 = bt2.reshape(Cout, 1).astype(jnp.float32)

    kernel = partial(_conv_block_kernel, norm=norm, activation=activation, eps=eps)

    out = pl.pallas_call(
        kernel,
        out_shape=jax.ShapeDtypeStruct((B, Cout, L), x_nchw.dtype),
        grid_spec=pltpu.PrefetchScalarGridSpec(
            num_scalar_prefetch=0,
            grid=(B,),
            in_specs=[
                pl.BlockSpec((Cout, KKC), lambda b: (0, 0)),
                pl.BlockSpec((Cout, 1), lambda b: (0, 0)),
                pl.BlockSpec((Cout, 1), lambda b: (0, 0)),
                pl.BlockSpec((Cout, 1), lambda b: (0, 0)),
                pl.BlockSpec((1, KKC, L), lambda b: (b, 0, 0)),
            ],
            out_specs=pl.BlockSpec((1, Cout, L), lambda b: (b, 0, 0)),
        ),
        compiler_params=pltpu.CompilerParams(
            dimension_semantics=("parallel",)),
    )(w2d, b2, g2, bt2, patches)

    return out.reshape(B, Cout, Ho, Wo)   # already NCHW — no transpose needed


def res_block(x, w1, b1, w2, b2, *, compute_dtype=jnp.bfloat16):
    """MUNIT ResBlock as used by _netT64: two 3x3 'in'-norm conv blocks + skip."""
    h = conv2d_block(x, w1, b1, stride=1, padding=1, norm="in", activation="relu",
                     pad_type="reflect", compute_dtype=compute_dtype)
    h = conv2d_block(h, w2, b2, stride=1, padding=1, norm="in", activation="none",
                     pad_type="reflect", compute_dtype=compute_dtype)
    return x + h


# ----------------------------- pure-JAX reference ----------------------------

def _ref_conv_block(x, w, b, *, stride, padding, norm, activation, pad_type,
                    gamma=None, beta=None, eps=1e-5,
                    compute_dtype=jnp.float32):
    xp = jnp.pad(x, ((0, 0), (0, 0), (padding, padding), (padding, padding)),
                 mode=_PAD_MODE[pad_type])
    y = jax.lax.conv_general_dilated(
        xp.astype(compute_dtype), w.astype(compute_dtype),
        (stride, stride), "VALID",
        dimension_numbers=("NCHW", "OIHW", "NCHW"),
        preferred_element_type=jnp.float32)
    y = y + b.astype(jnp.float32)[None, :, None, None]
    if norm == "in":
        m = jnp.mean(y, axis=(2, 3), keepdims=True)
        v = jnp.mean(jnp.square(y - m), axis=(2, 3), keepdims=True)
        y = (y - m) * jax.lax.rsqrt(v + eps)
    elif norm == "ln":
        Bn = y.shape[0]
        flat = y.reshape(Bn, -1)
        m = flat.mean(axis=1).reshape(Bn, 1, 1, 1)
        s = jnp.std(flat, axis=1, ddof=1).reshape(Bn, 1, 1, 1)
        y = (y - m) / (s + eps)
        y = y * gamma.reshape(1, -1, 1, 1) + beta.reshape(1, -1, 1, 1)
    if activation == "relu":
        y = jnp.maximum(y, 0.0)
    elif activation == "lrelu":
        y = jnp.where(y >= 0.0, y, 0.2 * y)
    elif activation == "tanh":
        y = jnp.tanh(y)
    return y.astype(x.dtype)


def _ref_res_block(x, w1, b1, w2, b2, *, compute_dtype=jnp.float32):
    h = _ref_conv_block(x, w1, b1, stride=1, padding=1, norm="in",
                        activation="relu", pad_type="reflect",
                        compute_dtype=compute_dtype)
    h = _ref_conv_block(h, w2, b2, stride=1, padding=1, norm="in",
                        activation="none", pad_type="reflect",
                        compute_dtype=compute_dtype)
    return x + h


# ------------------------------------ demo -----------------------------------

def _init_conv(key, cout, cin, k):
    kw, kb = jax.random.split(key)
    bound = (cin * k * k) ** -0.5
    w = jax.random.uniform(kw, (cout, cin, k, k), minval=-bound, maxval=bound,
                           dtype=jnp.float32)
    b = jax.random.uniform(kb, (cout,), minval=-bound, maxval=bound,
                           dtype=jnp.float32)
    return w, b


def _check(name, out, ref, atol, rtol):
    assert out.shape == ref.shape, (name, out.shape, ref.shape)
    err = float(jnp.max(jnp.abs(out.astype(jnp.float32) - ref.astype(jnp.float32))))
    assert jnp.allclose(out, ref, atol=atol, rtol=rtol), \
        f"{name}: mismatch vs reference (max abs err {err})"


if __name__ == "__main__":
    keys = jax.random.split(jax.random.PRNGKey(0), 16)

    # A) Baseline config from the previous version (zero pad, no norm, relu), f32.
    xA = jax.random.normal(keys[0], (2, 4, 16, 16), jnp.float32)
    wA, bA = _init_conv(keys[1], 8, 4, 3)
    outA = conv2d_block(xA, wA, bA, stride=1, padding=1, norm="none",
                        activation="relu", pad_type="zero",
                        compute_dtype=jnp.float32)
    jax.block_until_ready(outA)
    refA = _ref_conv_block(xA, wA, bA, stride=1, padding=1, norm="none",
                           activation="relu", pad_type="zero")
    _check("A zero/none/relu", outA, refA, 2e-4, 2e-4)

    # B) _netT64 ContentEncoder first layer: Conv2dBlock(3,64,7,1,3,'in','relu','reflect'), bf16.
    xB = jax.random.normal(keys[2], (2, 3, 16, 16), jnp.float32)
    wB, bB = _init_conv(keys[3], 64, 3, 7)
    outB = conv2d_block(xB, wB, bB, stride=1, padding=3, norm="in",
                        activation="relu", pad_type="reflect",
                        compute_dtype=jnp.bfloat16)
    jax.block_until_ready(outB)
    refB = _ref_conv_block(xB, wB, bB, stride=1, padding=3, norm="in",
                           activation="relu", pad_type="reflect",
                           compute_dtype=jnp.bfloat16)
    _check("B encoder 7x7 'in'", outB, refB, 5e-3, 5e-3)

    # C) Downsample layer style: Conv2dBlock(dim,2dim,4,2,1,'in','relu','reflect'), bf16.
    xC = jax.random.normal(keys[4], (2, 8, 16, 16), jnp.float32)
    wC, bC = _init_conv(keys[5], 16, 8, 4)
    outC = conv2d_block(xC, wC, bC, stride=2, padding=1, norm="in",
                        activation="relu", pad_type="reflect",
                        compute_dtype=jnp.bfloat16)
    jax.block_until_ready(outC)
    refC = _ref_conv_block(xC, wC, bC, stride=2, padding=1, norm="in",
                           activation="relu", pad_type="reflect",
                           compute_dtype=jnp.bfloat16)
    _check("C stride-2 'in'", outC, refC, 5e-3, 5e-3)

    # D) Decoder upsample-conv style: Conv2dBlock(dim,dim/2,5,1,2,'ln','relu','reflect'), bf16.
    xD = jax.random.normal(keys[6], (2, 16, 8, 8), jnp.float32)
    wD, bD = _init_conv(keys[7], 8, 16, 5)
    gD = jax.random.uniform(keys[8], (8,), dtype=jnp.float32)   # LayerNorm gamma ~ U(0,1)
    btD = jnp.zeros((8,), jnp.float32)
    outD = conv2d_block(xD, wD, bD, stride=1, padding=2, norm="ln",
                        activation="relu", pad_type="reflect",
                        gamma=gD, beta=btD, compute_dtype=jnp.bfloat16)
    jax.block_until_ready(outD)
    refD = _ref_conv_block(xD, wD, bD, stride=1, padding=2, norm="ln",
                           activation="relu", pad_type="reflect",
                           gamma=gD, beta=btD, compute_dtype=jnp.bfloat16)
    _check("D 5x5 'ln'", outD, refD, 5e-3, 5e-3)

    # E) Decoder output layer: Conv2dBlock(dim,3,7,1,3,'none','tanh','reflect'), bf16.
    xE = jax.random.normal(keys[9], (2, 16, 16, 16), jnp.float32)
    wE, bE = _init_conv(keys[10], 3, 16, 7)
    outE = conv2d_block(xE, wE, bE, stride=1, padding=3, norm="none",
                        activation="tanh", pad_type="reflect",
                        compute_dtype=jnp.bfloat16)
    jax.block_until_ready(outE)
    refE = _ref_conv_block(xE, wE, bE, stride=1, padding=3, norm="none",
                           activation="tanh", pad_type="reflect",
                           compute_dtype=jnp.bfloat16)
    _check("E 7x7 tanh", outE, refE, 5e-3, 5e-3)

    # F) ResBlock composition (two 'in' conv blocks + residual), f32.
    xF = jax.random.normal(keys[11], (2, 16, 8, 8), jnp.float32)
    wF1, bF1 = _init_conv(keys[12], 16, 16, 3)
    wF2, bF2 = _init_conv(keys[13], 16, 16, 3)
    outF = res_block(xF, wF1, bF1, wF2, bF2, compute_dtype=jnp.float32)
    jax.block_until_ready(outF)
    refF = _ref_res_block(xF, wF1, bF1, wF2, bF2)
    _check("F ResBlock", outF, refF, 2e-3, 2e-3)

    print("KERNEL_OK")
</pallas_src>

<mosaic_0001>
module attributes {stable_mosaic.version = 11 : i64} {
  func.func @_conv_block_kernel(%arg0: i32, %arg1: memref<8x36xf32, #tpu.memory_space<vmem>>, %arg2: memref<8x1xf32, #tpu.memory_space<vmem>>, %arg3: memref<8x1xf32, #tpu.memory_space<vmem>>, %arg4: memref<8x1xf32, #tpu.memory_space<vmem>>, %arg5: memref<1x36x256xf32, #tpu.memory_space<vmem>>, %arg6: memref<1x8x256xf32, #tpu.memory_space<vmem>>) attributes {dimension_semantics = [#tpu.dimension_semantics<parallel>], iteration_bounds = array<i64: 2>, scalar_prefetch = 0 : i64, scratch_operands = 0 : i64, tpu.core_type = #tpu.core_type<tc>, window_params = [{pipeline_mode = #tpu.pipeline_mode<synchronous>, transform_indices = @transform_0, window_bounds = array<i64: 8, 36>}, {pipeline_mode = #tpu.pipeline_mode<synchronous>, transform_indices = @transform_1, window_bounds = array<i64: 8, 1>}, {pipeline_mode = #tpu.pipeline_mode<synchronous>, transform_indices = @transform_2, window_bounds = array<i64: 8, 1>}, {pipeline_mode = #tpu.pipeline_mode<synchronous>, transform_indices = @transform_3, window_bounds = array<i64: 8, 1>}, {transform_indices = @transform_4, window_bounds = array<i64: 1, 36, 256>}, {transform_indices = @transform_5, window_bounds = array<i64: 1, 8, 256>}]} {
    %c0 = arith.constant 0 : index
    %c0_0 = arith.constant 0 : index
    %0 = vector.load %arg1[%c0, %c0_0] : memref<8x36xf32, #tpu.memory_space<vmem>>, vector<8x36xf32>
    %c0_1 = arith.constant 0 : index
    %c0_2 = arith.constant 0 : index
    %c0_3 = arith.constant 0 : index
    %1 = vector.load %arg5[%c0_1, %c0_2, %c0_3] : memref<1x36x256xf32, #tpu.memory_space<vmem>>, vector<1x36x256xf32>
    %2 = vector.shape_cast %1 : vector<1x36x256xf32> to vector<36x256xf32>
    %cst = arith.constant dense<0.000000e+00> : vector<8x256xf32>
    %3 = tpu.matmul %0, %2, %cst {dimension_numbers = #tpu.dot_dimension_numbers<[1], [0], [0], [1], [0, 0, 1, 1], [], []>} : vector<8x36xf32>, vector<36x256xf32>, vector<8x256xf32> -> vector<8x256xf32>
    %c0_4 = arith.constant 0 : index
    %c0_5 = arith.constant 0 : index
    %4 = vector.load %arg2[%c0_4, %c0_5] : memref<8x1xf32, #tpu.memory_space<vmem>>, vector<8x1xf32>
    %5 = vector.broadcast %4 : vector<8x1xf32> to vector<8x256xf32>
    %6 = arith.addf %3, %5 : vector<8x256xf32>
    %cst_6 = arith.constant 0.000000e+00 : f32
    %7 = vector.broadcast %cst_6 : f32 to vector<8x256xf32>
    %8 = arith.maximumf %6, %7 : vector<8x256xf32>
    %c0_7 = arith.constant 0 : index
    %c0_8 = arith.constant 0 : index
    %c0_9 = arith.constant 0 : index
    %9 = vector.load %arg6[%c0_7, %c0_8, %c0_9] : memref<1x8x256xf32, #tpu.memory_space<vmem>>, vector<1x8x256xf32>
    %10 = vector.shape_cast %9 : vector<1x8x256xf32> to vector<8x256xf32>
    %11 = vector.shape_cast %8 : vector<8x256xf32> to vector<1x8x256xf32>
    tpu.vector_store %arg6[%c0_7, %c0_8, %c0_9], %11 {strides = array<i32>} : memref<1x8x256xf32, #tpu.memory_space<vmem>>, vector<1x8x256xf32>,
    return
  }
  func.func @transform_0(%arg0: i32) -> (i32, i32) {
    %c0_i32 = arith.constant 0 : i32
    %c0_i32_0 = arith.constant 0 : i32
    %c0_i32_1 = arith.constant 0 : i32
    return %c0_i32, %c0_i32_0 : i32, i32
  }
  func.func @transform_1(%arg0: i32) -> (i32, i32) {
    %c0_i32 = arith.constant 0 : i32
    %c0_i32_0 = arith.constant 0 : i32
    %c0_i32_1 = arith.constant 0 : i32
    return %c0_i32, %c0_i32_0 : i32, i32
  }
  func.func @transform_2(%arg0: i32) -> (i32, i32) {
    %c0_i32 = arith.constant 0 : i32
    %c0_i32_0 = arith.constant 0 : i32
    %c0_i32_1 = arith.constant 0 : i32
    return %c0_i32, %c0_i32_0 : i32, i32
  }
  func.func @transform_3(%arg0: i32) -> (i32, i32) {
    %c0_i32 = arith.constant 0 : i32
    %c0_i32_0 = arith.constant 0 : i32
    %c0_i32_1 = arith.constant 0 : i32
    return %c0_i32, %c0_i32_0 : i32, i32
  }
  func.func @transform_4(%arg0: i32) -> (i32, i32, i32) {
    %c0_i32 = arith.constant 0 : i32
    %c0_i32_0 = arith.constant 0 : i32
    %c0_i32_1 = arith.constant 0 : i32
    return %arg0, %c0_i32, %c0_i32_0 : i32, i32, i32
  }
  func.func @transform_5(%arg0: i32) -> (i32, i32, i32) {
    %c0_i32 = arith.constant 0 : i32
    %c0_i32_0 = arith.constant 0 : i32
    %c0_i32_1 = arith.constant 0 : i32
    return %arg0, %c0_i32, %c0_i32_0 : i32, i32, i32
  }
}

</mosaic_0001>

<llo_original>
// kernel: tpu_custom_call.1
$region0: #{tpu_custom_call.1}
  #allocation0 [shape = 'u32[]', space=smem, size = 0x4, offset = 0x4, fixed_abs, tag = 'smem constant byte address 0x4 - core index']
  #allocation1 [shape = 'u32[72,128]{1,0:T(1,128)}', space=vmem, size = 0x9000, scoped, tag = 'internal scratch']
  %s0 = inlined_call_operand.vmem [shape: f32[8,36], index: 0, kind: input, shape index: {}]
  %s1 = inlined_call_operand.vmem [shape: f32[8,1], index: 1, kind: input, shape index: {}]
  %s2 = inlined_call_operand.vmem [shape: f32[8,1], index: 2, kind: input, shape index: {}]
  %s3 = inlined_call_operand.vmem [shape: f32[8,1], index: 3, kind: input, shape index: {}]
  %s4 = inlined_call_operand.vmem [shape: f32[2,36,256], index: 4, kind: input, shape index: {}]
  %s5 = inlined_call_operand.hbm [shape: f32[2,8,256], index: 5, kind: output, shape index: {}]
  %s6 = sld [smem:[#allocation0]]
  $region53: #{tpu_custom_call.1} parent=0
    _
  %s8 = ssub.s32 1, %s6
  %s9 = scalar_select 0, %s8, %s6
  $region1: #{tpu_custom_call.1} parent=0
    #allocation2 [shape = 'u8[16384]{0}', space=vmem, size = 0x4000, scoped, tag = 'output window, operand 0']
    #allocation3 [shape = 's32[2]{0}', space=sflag, size = 0x8, scoped, tag = 'scoped memory for tpu_custom_call.1']
    %10 = vsyncpa [#allocation3], 0
    %s11 = scalar_lea.sflag [#allocation3], 1
    %12 = vsyncpa %s11, 0
    loop: start=0, step=1, limit=4
    $region2: #{tpu_custom_call.1} parent=1 // loop_pre_header
      _
    $region3: #{tpu_custom_call.1} parent=1 // loop_header
      %s14 = sphi 0, %s18
      %p15 = scmp.ge.s32.totalorder %s14, 4
      %s22 = sphi 0, %s22
      %s24 = sphi 0, %s22
      %s25 = sphi 0, %s24
      %s39 = sphi 0, %s25
      %s43 = sphi 0, %s43
      %s45 = sphi 0, %s43
      %s46 = sphi 0, %s45
      %s60 = sphi 0, %s46
      %s64 = sphi 0, %s64
      %s66 = sphi 0, %s64
      %s67 = sphi 0, %s66
      %s81 = sphi 0, %s67
      %s85 = sphi 0, %s85
      %s87 = sphi 0, %s85
      %s88 = sphi 0, %s87
      %s102 = sphi 0, %s88
      %s108 = sphi 0, %s110
      %s111 = sphi 0, %s108
      %s112 = sphi 0, %s111
      %s128 = sphi 0, %s112
      %s134 = sphi 0, %s136
      %s137 = sphi 0, %s134
      %s138 = sphi 0, %s137
      %s154 = sphi 0, %s138
    $region4: #{tpu_custom_call.1} parent=1 // loop_header_branch
      %17 = sbr.rel (%p15) target = $region8
    $region5: #{tpu_custom_call.1} parent=1 // loop_body
      %s19 = ssub.s32 %s14, 1
      %s20 = ssub.s32 %s14, 2
      %s21 = sadd.s32 %s14, 1
      %s23 = sadd.s32 %s22, 1
      %p26 = scmp.eq.s32.totalorder %s14, 1
      %p27 = scmp.ne.s32.totalorder %s22, %s24
      %p28 = scmp.eq.s32.totalorder %s14, 0
      %p29 = por %p27, %p28
      %p30 = scmp.ne.s32.totalorder %s22, %s24
      %p31 = scmp.eq.s32.totalorder %s19, 1
      %p32 = por %p30, %p31
      %p33 = scmp.ne.s32.totalorder %s24, %s25
      %p34 = scmp.eq.s32.totalorder %s19, 0
      %p35 = por %p33, %p34
      %p36 = scmp.ne.s32.totalorder %s24, %s25
      %p37 = scmp.eq.s32.totalorder %s20, 1
      %p38 = por %p36, %p37
      %p40 = scmp.ne.s32.totalorder %s25, %s39
      %p41 = scmp.eq.s32.totalorder %s20, 0
      %p42 = por %p40, %p41
      %s44 = sadd.s32 %s43, 1
      %p47 = scmp.eq.s32.totalorder %s14, 1
      %p48 = scmp.ne.s32.totalorder %s43, %s45
      %p49 = scmp.eq.s32.totalorder %s14, 0
      %p50 = por %p48, %p49
      %p51 = scmp.ne.s32.totalorder %s43, %s45
      %p52 = scmp.eq.s32.totalorder %s19, 1
      %p53 = por %p51, %p52
      %p54 = scmp.ne.s32.totalorder %s45, %s46
      %p55 = scmp.eq.s32.totalorder %s19, 0
      %p56 = por %p54, %p55
      %p57 = scmp.ne.s32.totalorder %s45, %s46
      %p58 = scmp.eq.s32.totalorder %s20, 1
      %p59 = por %p57, %p58
      %p61 = scmp.ne.s32.totalorder %s46, %s60
      %p62 = scmp.eq.s32.totalorder %s20, 0
      %p63 = por %p61, %p62
      %s65 = sadd.s32 %s64, 1
      %p68 = scmp.eq.s32.totalorder %s14, 1
      %p69 = scmp.ne.s32.totalorder %s64, %s66
      %p70 = scmp.eq.s32.totalorder %s14, 0
      %p71 = por %p69, %p70
      %p72 = scmp.ne.s32.totalorder %s64, %s66
      %p73 = scmp.eq.s32.totalorder %s19, 1
      %p74 = por %p72, %p73
      %p75 = scmp.ne.s32.totalorder %s66, %s67
      %p76 = scmp.eq.s32.totalorder %s19, 0
      %p77 = por %p75, %p76
      %p78 = scmp.ne.s32.totalorder %s66, %s67
      %p79 = scmp.eq.s32.totalorder %s20, 1
      %p80 = por %p78, %p79
      %p82 = scmp.ne.s32.totalorder %s67, %s81
      %p83 = scmp.eq.s32.totalorder %s20, 0
      %p84 = por %p82, %p83
      %s86 = sadd.s32 %s85, 1
      %p89 = scmp.eq.s32.totalorder %s14, 1
      %p90 = scmp.ne.s32.totalorder %s85, %s87
      %p91 = scmp.eq.s32.totalorder %s14, 0
      %p92 = por %p90, %p91
      %p93 = scmp.ne.s32.totalorder %s85, %s87
      %p94 = scmp.eq.s32.totalorder %s19, 1
      %p95 = por %p93, %p94
      %p96 = scmp.ne.s32.totalorder %s87, %s88
      %p97 = scmp.eq.s32.totalorder %s19, 0
      %p98 = por %p96, %p97
      %p99 = scmp.ne.s32.totalorder %s87, %s88
      %p100 = scmp.eq.s32.totalorder %s20, 1
      %p101 = por %p99, %p100
      %p103 = scmp.ne.s32.totalorder %s88, %s102
      %p104 = scmp.eq.s32.totalorder %s20, 0
      %p105 = por %p103, %p104
      %s106 = ssub.s32 %s14, %s21
      %p107 = scmp.eq.s32.totalorder %s106, 0
      %s109 = sadd.s32 %s108, 1
      %s110 = scalar_select %p107, %s108, %s109
      %p113 = pneg %p107
      %p114 = scmp.eq.s32.totalorder %s14, 1
      %p115 = por %p113, %p114
      %p116 = scmp.ne.s32.totalorder %s108, %s111
      %p117 = scmp.eq.s32.totalorder %s14, 0
      %p118 = por %p116, %p117
      %p119 = scmp.ne.s32.totalorder %s108, %s111
      %p120 = scmp.eq.s32.totalorder %s19, 1
      %p121 = por %p119, %p120
      %p122 = scmp.ne.s32.totalorder %s111, %s112
      %p123 = scmp.eq.s32.totalorder %s19, 0
      %p124 = por %p122, %p123
      %p125 = scmp.ne.s32.totalorder %s111, %s112
      %p126 = scmp.eq.s32.totalorder %s20, 1
      %p127 = por %p125, %p126
      %p129 = scmp.ne.s32.totalorder %s112, %s128
      %p130 = scmp.eq.s32.totalorder %s20, 0
      %p131 = por %p129, %p130
      %s132 = ssub.s32 %s14, %s21
      %p133 = scmp.eq.s32.totalorder %s132, 0
      %s135 = sadd.s32 %s134, 1
      %s136 = scalar_select %p133, %s134, %s135
      %p139 = pneg %p133
      %p140 = scmp.eq.s32.totalorder %s14, 1
      %p141 = por %p139, %p140
      %p142 = scmp.ne.s32.totalorder %s134, %s137
      %p143 = scmp.eq.s32.totalorder %s14, 0
      %p144 = por %p142, %p143
      %p145 = scmp.ne.s32.totalorder %s134, %s137
      %p146 = scmp.eq.s32.totalorder %s19, 1
      %p147 = por %p145, %p146
      %p148 = scmp.ne.s32.totalorder %s137, %s138
      %p149 = scmp.eq.s32.totalorder %s19, 0
      %p150 = por %p148, %p149
      %p151 = scmp.ne.s32.totalorder %s137, %s138
      %p152 = scmp.eq.s32.totalorder %s20, 1
      %p153 = por %p151, %p152
      %p155 = scmp.ne.s32.totalorder %s138, %s154
      %p156 = scmp.eq.s32.totalorder %s20, 0
      %p157 = por %p155, %p156
      %p158 = scmp.le.s32.totalorder 1, %s14
      %p159 = scmp.lt.s32.totalorder %s14, 3
      %p160 = pnand %p158, %p159
      %p161 = pneg %p160
      // Predicated region
      $region9: #{tpu_custom_call.1} parent=5 // pred_check
        _
      $region10: #{tpu_custom_call.1} parent=5 // pred_check_branch
        %163 = sbr.rel (%p160) target = $region12
      $region11: #{tpu_custom_call.1} parent=5 // pred_region
        %s164 = ssub.s32 %s14, 1
        // Predicated region
        $region13: #{tpu_custom_call.1} parent=11 // pred_check
          %p165 = pneg %p35
        $region14: #{tpu_custom_call.1} parent=11 // pred_check_branch
          %167 = sbr.rel (%p165) target = $region16
        $region15: #{tpu_custom_call.1} parent=11 // pred_region
          _
        $region16: #{tpu_custom_call.1} parent=11 // pred_fallthru
          _
        // Predicated region
        $region17: #{tpu_custom_call.1} parent=11 // pred_check
          %p168 = pneg %p56
        $region18: #{tpu_custom_call.1} parent=11 // pred_check_branch
          %170 = sbr.rel (%p168) target = $region20
        $region19: #{tpu_custom_call.1} parent=11 // pred_region
          _
        $region20: #{tpu_custom_call.1} parent=11 // pred_fallthru
          _
        // Predicated region
        $region21: #{tpu_custom_call.1} parent=11 // pred_check
          %p171 = pneg %p77
        $region22: #{tpu_custom_call.1} parent=11 // pred_check_branch
          %173 = sbr.rel (%p171) target = $region24
        $region23: #{tpu_custom_call.1} parent=11 // pred_region
          _
        $region24: #{tpu_custom_call.1} parent=11 // pred_fallthru
          _
        // Predicated region
        $region25: #{tpu_custom_call.1} parent=11 // pred_check
          %p174 = pneg %p98
        $region26: #{tpu_custom_call.1} parent=11 // pred_check_branch
          %176 = sbr.rel (%p174) target = $region28
        $region27: #{tpu_custom_call.1} parent=11 // pred_region
          _
        $region28: #{tpu_custom_call.1} parent=11 // pred_fallthru
          _
      $region12: #{tpu_custom_call.1} parent=5 // pred_fallthru
        _
      %p177 = scmp.lt.s32.totalorder %s14, 2
      // Predicated region
      $region29: #{tpu_custom_call.1} parent=5 // pred_check
        %p178 = pneg %p177
      $region30: #{tpu_custom_call.1} parent=5 // pred_check_branch
        %180 = sbr.rel (%p178) target = $region32
      $region31: #{tpu_custom_call.1} parent=5 // pred_region
        // Predicated region
        $region33: #{tpu_custom_call.1} parent=31 // pred_check
          %p181 = pneg %p118
        $region34: #{tpu_custom_call.1} parent=31 // pred_check_branch
          %183 = sbr.rel (%p181) target = $region36
        $region35: #{tpu_custom_call.1} parent=31 // pred_region
          %p184 = scmp.lt.s32.totalorder %s14, 1
          %s185 = scalar_select %p184, %s14, 1
          %s186 = smul.addr %s185, 10
          %s187 = smul.addr %s186, 8
          %s188 = scalar_lea.vmem %s4, %s187
        $region36: #{tpu_custom_call.1} parent=31 // pred_fallthru
          _
      $region32: #{tpu_custom_call.1} parent=5 // pred_fallthru
        _
      %p189 = scmp.le.s32.totalorder 1, %s14
      %p190 = scmp.lt.s32.totalorder %s14, 3
      %p191 = pnand %p189, %p190
      %p192 = pneg %p191
      // Predicated region
      $region37: #{tpu_custom_call.1} parent=5 // pred_check
        _
      $region38: #{tpu_custom_call.1} parent=5 // pred_check_branch
        %194 = sbr.rel (%p191) target = $region40
      $region39: #{tpu_custom_call.1} parent=5 // pred_region
        %s195 = ssub.s32 %s14, 1
        %p196 = pneg %p35
        %p197 = pneg %p32
        %p198 = pneg %p56
        %p199 = pneg %p53
        %p200 = pneg %p77
        %p201 = pneg %p74
        %p202 = pneg %p98
        %p203 = pneg %p95
        %p204 = scmp.lt.s32.totalorder %s19, 1
        %s205 = scalar_select %p204, %s19, 1
        %s206 = smul.addr %s205, 10
        %s207 = smul.addr %s206, 8
        %s208 = scalar_lea.vmem %s4, %s207
        %p209 = pneg %p124
        %p210 = pneg %p121
        %p211 = pneg %p150
        %p212 = pneg %p147
        %s213 = sand.u32 %s137, 1
        %s214 = scalar_lea.sflag [#allocation3], %s213
        %s215 = sand.u32 %s137, 1
        %s216 = smul.addr %s215, 16
        %s217 = scalar_lea.vmem [#allocation2], %s216
        %p218 = scmp.lt.s32.totalorder %s19, 1
        %s219 = scalar_select %p218, %s19, 1
        %s220 = smul.addr %s219, 10
        %s221 = smul.addr %s220, 8
        %s222 = scalar_lea.vmem %s4, %s221
        %v223 = vld [vmem:[%s0] sm:$0xff]
        %v224 = vld [vmem:[%s222] sm:$0xff]
        %v225 = vld [vmem:[%s222 + $0x8] sm:$0xff]
        %v226 = vld [vmem:[%s222 + $0x10] sm:$0xff]
        %v227 = vld [vmem:[%s222 + $0x18] sm:$0xff]
        %v228 = vld [vmem:[%s222 + $0x20] sm:$0xff]
        %v229 = vld [vmem:[%s222 + $0x28] sm:$0xff]
        %v230 = vld [vmem:[%s222 + $0x30] sm:$0xff]
        %v231 = vld [vmem:[%s222 + $0x38] sm:$0xff]
        %v232 = vld [vmem:[%s222 + $0x40] sm:$0xf]
        %v233 = vld [vmem:[%s222 + $0x48] sm:$0xf]
        %v234 = vld [vmem:[%s1] sm:$0xff]
        %236 = vset.pattern.permute.xlu0 0
        %237 = vperm.xlu0 %236, %v234
        %v238 = vpop.permute.xlu0 %237
        %vm240 = vcmask 293888
        %v242 = vsel %vm240, %v223, 0
        %vm244 = vcmask 1043456
        %v246 = vsel %vm244, %v232, 0
        %v249 = vsel %vm244, %v233, 0
        %251 = vmatpush.msra.mxu0 0.0
        %252 = vmatpush.msra.mxu0 0.0
        %253 = vmatpush.msra.mxu0 0.0
        %254 = vmatpush.msra.mxu0 0.0
        %255 = vmatpush.msra.mxu0 0.0
        %256 = vmatpush.msra.mxu0 0.0
        %257 = vmatpush.msra.mxu0 0.0
        %258 = vmatpush.msra.mxu0 0.0
        %259 = vmatpush.msra.mxu0 0.0
        %260 = vmatpush.msra.mxu0 0.0
        %261 = vmatpush.msra.mxu0 0.0
        %262 = vmatpush.msra.mxu0 %v246
        %263 = vmatpush.msra.mxu0 %v230
        %264 = vmatpush.msra.mxu0 %v228
        %265 = vmatpush.msra.mxu0 %v226
        %266 = vmatpush.msra.mxu0 %v224
        %267 = vmatmul.f32.gmra.mxu0 %v242
        %v268 = vpop.f32.mrf.mxu0
        %v269 = vadd.f32 %v238, %v268
        %270 = vdwg.mxu0
        %271 = vmatpush.msra.mxu0 0.0
        %272 = vmatpush.msra.mxu0 0.0
        %273 = vmatpush.msra.mxu0 0.0
        %274 = vmatpush.msra.mxu0 0.0
        %275 = vmatpush.msra.mxu0 0.0
        %276 = vmatpush.msra.mxu0 0.0
        %277 = vmatpush.msra.mxu0 0.0
        %278 = vmatpush.msra.mxu0 0.0
        %279 = vmatpush.msra.mxu0 0.0
        %280 = vmatpush.msra.mxu0 0.0
        %281 = vmatpush.msra.mxu0 0.0
        %282 = vmatpush.msra.mxu0 %v249
        %283 = vmatpush.msra.mxu0 %v231
        %284 = vmatpush.msra.mxu0 %v229
        %285 = vmatpush.msra.mxu0 %v227
        %286 = vmatpush.msra.mxu0 %v225
        %287 = vmatmul.f32.gmra.mxu0 %v242
        %v288 = vpop.f32.mrf.mxu0
        %v289 = vadd.f32 %v238, %v288
        %290 = vdwg.mxu0
        %v291 = vmax.f32 %v269, 0.0
        %v292 = vmax.f32 %v289, 0.0
        %293 = vst [vmem:[%s217] sm:$0xff] %v291
        %294 = vst [vmem:[%s217 + $0x8] sm:$0xff] %v292
        %s295 = sand.u32 %s137, 1
        %s296 = scalar_lea.sflag [#allocation3], %s295
        %s297 = sand.u32 %s137, 1
        %s298 = smul.addr %s297, 16
        %s299 = scalar_lea.vmem [#allocation2], %s298
        // Predicated region
        $region41: #{tpu_custom_call.1} parent=39 // pred_check
          %p300 = pneg %p147
        $region42: #{tpu_custom_call.1} parent=39 // pred_check_branch
          %302 = sbr.rel (%p300) target = $region44
        $region43: #{tpu_custom_call.1} parent=39 // pred_region
          %304 = vsyncadd %s296, 0
          %s305 = smul.addr %s19, 2
          %s306 = smul.addr %s305, 8
          %s307 = scalar_lea.hbm %s5, %s306
          %s309 = sshll.u32 %s299, 4
          %s310 = int_to_ptr.vmem [resolvable:$true] %s309
          %s311 = sshll.u32 %s307, 4
          %s312 = int_to_ptr.hbm [resolvable:$true] %s311
          %314 = dma.vmem_to_hbm [thread:$0]  %s310, 256, %s312, %s296
        $region44: #{tpu_custom_call.1} parent=39 // pred_fallthru
          _
      $region40: #{tpu_custom_call.1} parent=5 // pred_fallthru
        _
      %p315 = scmp.le.s32.totalorder 2, %s14
      // Predicated region
      $region45: #{tpu_custom_call.1} parent=5 // pred_check
        %p316 = pneg %p315
      $region46: #{tpu_custom_call.1} parent=5 // pred_check_branch
        %318 = sbr.rel (%p316) target = $region48
      $region47: #{tpu_custom_call.1} parent=5 // pred_region
        %s319 = ssub.s32 %s14, 2
        // Predicated region
        $region49: #{tpu_custom_call.1} parent=47 // pred_check
          %p320 = pneg %p153
        $region50: #{tpu_custom_call.1} parent=47 // pred_check_branch
          %322 = sbr.rel (%p320) target = $region52
        $region51: #{tpu_custom_call.1} parent=47 // pred_region
          %s323 = sand.u32 %s138, 1
          %s324 = scalar_lea.sflag [#allocation3], %s323
          %s325 = sand.u32 %s138, 1
          %s326 = smul.addr %s325, 16
          %s327 = scalar_lea.vmem [#allocation2], %s326
          %329 = dma.done %s324, 256
        $region52: #{tpu_custom_call.1} parent=47 // pred_fallthru
          _
      $region48: #{tpu_custom_call.1} parent=5 // pred_fallthru
        _
    $region6: #{tpu_custom_call.1} parent=1 // loop_footer
      %s18 = sadd.s32 1, %s14
    $region7: #{tpu_custom_call.1} parent=1 // loop_footer_branch
      %13 = sbr.rel target = $region3
    $region8: #{tpu_custom_call.1} parent=1 // loop_exit
      _
    %330 = vsyncpa [#allocation3], 1
    %s331 = scalar_lea.sflag [#allocation3], 1
    %332 = vsyncpa %s331, 1

</llo_original>
